<compile_context>
chip_gen: v5e
topology: v5e:2x2
jax: 0.10.0
libtpu: 0.0.40
codegen_flags: <defaults>
</compile_context>

<pallas_src>
import functools
import math

import jax
import jax.numpy as jnp
from jax.experimental import pallas as pl
from jax.experimental.pallas import tpu as pltpu


def _build_pe_table(max_len: int, dim: int) -> jnp.ndarray:
    """Sinusoidal table, identical to the PyTorch __init__ (shape (max_len, dim))."""
    assert dim % 2 == 0, "sin/cos positional encoding requires an even dim"
    position = jnp.arange(0, max_len, dtype=jnp.float32)[:, None]              # (L, 1)
    div_term = jnp.exp(
        jnp.arange(0, dim, 2, dtype=jnp.float32) * -(math.log(10000.0) / dim)
    )                                                                           # (dim/2,)
    angles = position * div_term[None, :]                                       # (L, dim/2)
    pe = jnp.zeros((max_len, dim), dtype=jnp.float32)
    pe = pe.at[:, 0::2].set(jnp.sin(angles))
    pe = pe.at[:, 1::2].set(jnp.cos(angles))
    return pe


def _pos_enc_kernel(emb_ref, pe_ref, out_ref, *, scale):
    # emb_ref: (TS, B, D); pe_ref: (TS, D) (per-tile rows) or (1, D) (step path).
    # Pure VPU elementwise; the kernel is HBM-bandwidth bound, so no compute tricks.
    emb = emb_ref[...].astype(jnp.float32)
    pe = pe_ref[...].astype(jnp.float32)
    out_ref[...] = (emb * scale + pe[:, None, :]).astype(out_ref.dtype)


def _choose_row_tile(seq_len, batch, dim, itemsize, target_bytes=2 * 1024 * 1024):
    """Row-tile over seq_len: multiple of 8 (pe-block sublane tiling), <= ~2 MiB/block.

    2 MiB blocks keep the double-buffered footprint well inside v7x's 64 MiB VMEM
    (and the 16/32 MiB scoped defaults on v5e/v6e) while being large enough to
    amortize the ~0.35 us per-grid-step overhead against HBM bandwidth.
    """
    if seq_len < 8:
        return seq_len
    bytes_per_row = max(1, batch * dim * itemsize)
    ts = target_bytes // bytes_per_row
    ts = max(8, min(512, (ts // 8) * 8))
    ts = min(ts, (seq_len // 8) * 8)
    return ts


def positional_encoding(emb, pe_table, step=None):
    """Forward pass of PositionalEncoding.

    Args:
      emb: (seq_len, batch, dim) float array.
      pe_table: (max_len, dim) float32 sinusoidal table.
      step: optional int; if given, uses pe_table[step] for every position
            (the PyTorch stepwise decoding path, normally seq_len == 1).
    Returns:
      (seq_len, batch, dim) array of emb's dtype.
    """
    seq_len, batch, dim = emb.shape
    scale = math.sqrt(dim)
    itemsize = jnp.dtype(emb.dtype).itemsize
    ts = _choose_row_tile(seq_len, batch, dim, itemsize)
    grid = (pl.cdiv(seq_len, ts),)

    if step is None:
        if seq_len < 8:
            # Tiny sequence: a (seq_len, dim) pe block keeps the sublane-tiling
            # constraint satisfied (block == full array dims).
            pe_arg = jax.lax.slice_in_dim(pe_table, 0, seq_len, axis=0)
            pe_spec = pl.BlockSpec((seq_len, dim), lambda i: (0, 0))
        else:
            # Full table in HBM; rows for tile i are selected by the index_map,
            # so no wrapper-side slice/copy of the table is materialized.
            pe_arg = pe_table
            pe_spec = pl.BlockSpec((ts, dim), lambda i: (i, 0))
    else:
        # Stepwise decode: pe[step] (1, dim) broadcast over every position/batch.
        pe_arg = jax.lax.dynamic_slice_in_dim(pe_table, step, 1, axis=0)
        pe_spec = pl.BlockSpec((1, dim), lambda i: (0, 0))

    emb_block_bytes = ts * batch * dim * itemsize
    pe_block_bytes = ts * dim * 4
    # Double-buffered in + out + pe, plus headroom; explicit so we never inherit
    # a too-small (v5e 16 MiB) or chip-inappropriate scoped-VMEM default.
    vmem_limit = int(min(32 * 1024 * 1024,
                         max(16 * 1024 * 1024,
                             4 * emb_block_bytes + 2 * pe_block_bytes + (1 << 20))))

    kernel = functools.partial(_pos_enc_kernel, scale=scale)

    out = pl.pallas_call(
        kernel,
        out_shape=jax.ShapeDtypeStruct((seq_len, batch, dim), emb.dtype),
        grid_spec=pltpu.PrefetchScalarGridSpec(
            num_scalar_prefetch=0,
            grid=grid,
            in_specs=[
                pl.BlockSpec((ts, batch, dim), lambda i: (i, 0, 0)),
                pe_spec,
            ],
            out_specs=pl.BlockSpec((ts, batch, dim), lambda i: (i, 0, 0)),
        ),
        compiler_params=pltpu.CompilerParams(
            dimension_semantics=("parallel",),   # lets v7x shard row tiles over 2 TCs
            vmem_limit_bytes=vmem_limit,
        ),
        cost_estimate=pl.CostEstimate(
            flops=2 * seq_len * batch * dim,
            transcendentals=0,
            bytes_accessed=(2 * seq_len * batch * dim * itemsize
                            + seq_len * dim * 4),
        ),
    )(emb, pe_arg)

    # TODO(synk): nn.Dropout is identity in eval mode; training-mode dropout
    # (pltpu.prng_seed / prng_random_bits masking in-kernel) is intentionally
    # not applied here.
    return out


if __name__ == "__main__":
    # Small shapes consistent with the module's (seq_len, batch, dim) input.
    seq_len, batch, dim, max_len = 8, 2, 32, 64

    key = jax.random.PRNGKey(0)
    emb = jax.random.normal(key, (seq_len, batch, dim), dtype=jnp.float32)
    pe_table = _build_pe_table(max_len, dim)

    # step=None path
    out = positional_encoding(emb, pe_table, step=None)
    jax.block_until_ready(out)
    ref = emb * math.sqrt(dim) + pe_table[:seq_len][:, None, :]
    assert jnp.allclose(out, ref, atol=1e-5, rtol=1e-5)

    # stepwise decode path (seq_len = 1, step = 3)
    emb1 = jax.random.normal(jax.random.PRNGKey(1), (1, batch, dim), dtype=jnp.float32)
    out1 = positional_encoding(emb1, pe_table, step=3)
    jax.block_until_ready(out1)
    ref1 = emb1 * math.sqrt(dim) + pe_table[3][None, None, :]
    assert jnp.allclose(out1, ref1, atol=1e-5, rtol=1e-5)

    print("KERNEL_OK")
</pallas_src>

<mosaic_0001>
module attributes {stable_mosaic.version = 11 : i64} {
  func.func @_pos_enc_kernel(%arg0: i32, %arg1: memref<8x2x32xf32, #tpu.memory_space<vmem>>, %arg2: memref<8x32xf32, #tpu.memory_space<vmem>>, %arg3: memref<8x2x32xf32, #tpu.memory_space<vmem>>) attributes {dimension_semantics = [#tpu.dimension_semantics<parallel>], iteration_bounds = array<i64: 1>, scalar_prefetch = 0 : i64, scratch_operands = 0 : i64, tpu.core_type = #tpu.core_type<tc>, window_params = [{transform_indices = @transform_0, window_bounds = array<i64: 8, 2, 32>}, {transform_indices = @transform_1, window_bounds = array<i64: 8, 32>}, {transform_indices = @transform_2, window_bounds = array<i64: 8, 2, 32>}]} {
    %c0 = arith.constant 0 : index
    %c0_0 = arith.constant 0 : index
    %c0_1 = arith.constant 0 : index
    %0 = vector.load %arg1[%c0, %c0_0, %c0_1] : memref<8x2x32xf32, #tpu.memory_space<vmem>>, vector<8x2x32xf32>
    %c0_2 = arith.constant 0 : index
    %c0_3 = arith.constant 0 : index
    %1 = vector.load %arg2[%c0_2, %c0_3] : memref<8x32xf32, #tpu.memory_space<vmem>>, vector<8x32xf32>
    %cst = arith.constant 5.65685415 : f32
    %2 = vector.broadcast %cst : f32 to vector<8x2x32xf32>
    %3 = arith.mulf %0, %2 : vector<8x2x32xf32>
    %4 = vector.shape_cast %1 : vector<8x32xf32> to vector<8x1x32xf32>
    %5 = vector.broadcast %4 : vector<8x1x32xf32> to vector<8x2x32xf32>
    %6 = arith.addf %3, %5 : vector<8x2x32xf32>
    %c0_4 = arith.constant 0 : index
    %c0_5 = arith.constant 0 : index
    %c0_6 = arith.constant 0 : index
    %7 = vector.load %arg3[%c0_4, %c0_5, %c0_6] : memref<8x2x32xf32, #tpu.memory_space<vmem>>, vector<8x2x32xf32>
    tpu.vector_store %arg3[%c0_4, %c0_5, %c0_6], %6 {strides = array<i32>} : memref<8x2x32xf32, #tpu.memory_space<vmem>>, vector<8x2x32xf32>,
    return
  }
  func.func @transform_0(%arg0: i32) -> (i32, i32, i32) {
    %c0_i32 = arith.constant 0 : i32
    %c0_i32_0 = arith.constant 0 : i32
    %c0_i32_1 = arith.constant 0 : i32
    return %arg0, %c0_i32, %c0_i32_0 : i32, i32, i32
  }
  func.func @transform_1(%arg0: i32) -> (i32, i32) {
    %c0_i32 = arith.constant 0 : i32
    %c0_i32_0 = arith.constant 0 : i32
    return %arg0, %c0_i32 : i32, i32
  }
  func.func @transform_2(%arg0: i32) -> (i32, i32, i32) {
    %c0_i32 = arith.constant 0 : i32
    %c0_i32_0 = arith.constant 0 : i32
    %c0_i32_1 = arith.constant 0 : i32
    return %arg0, %c0_i32, %c0_i32_0 : i32, i32, i32
  }
}

</mosaic_0001>

<llo_original>
// kernel: tpu_custom_call.1
$region0: #{tpu_custom_call.1}
  #allocation0 [shape = 'u32[]', space=smem, size = 0x4, offset = 0x4, fixed_abs, tag = 'smem constant byte address 0x4 - core index']
  #allocation1 [shape = 'u32[72,128]{1,0:T(1,128)}', space=vmem, size = 0x9000, scoped, tag = 'internal scratch']
  %s0 = inlined_call_operand.vmem [shape: f32[8,2,32], index: 0, kind: input, shape index: {}]
  %s1 = inlined_call_operand.vmem [shape: f32[64,32], index: 1, kind: input, shape index: {}]
  %s2 = inlined_call_operand.hbm [shape: f32[8,2,32], index: 2, kind: output, shape index: {}]
  %s3 = sld [smem:[#allocation0]]
  $region18: #{tpu_custom_call.1} parent=0
    _
  %s5 = ssub.s32 1, %s3
  %s6 = scalar_select 0, %s5, %s3
  $region1: #{tpu_custom_call.1} parent=0
    #allocation2 [shape = 'u8[8192]{0}', space=vmem, size = 0x2000, scoped, tag = 'output window, operand 0, single buffered']
    #allocation3 [shape = 's32[1]{0}', space=sflag, size = 0x4, scoped, tag = 'scoped memory for tpu_custom_call.1']
    %7 = vsyncpa [#allocation3], 0
    // Predicated region
    $region2: #{tpu_custom_call.1} parent=1 // pred_check
      _
    $region3: #{tpu_custom_call.1} parent=1 // pred_check_branch
      %9 = sbr.rel (0) target = $region5
    $region4: #{tpu_custom_call.1} parent=1 // pred_region
      _
    $region5: #{tpu_custom_call.1} parent=1 // pred_fallthru
      _
    // Predicated region
    $region6: #{tpu_custom_call.1} parent=1 // pred_check
      _
    $region7: #{tpu_custom_call.1} parent=1 // pred_check_branch
      %11 = sbr.rel (0) target = $region9
    $region8: #{tpu_custom_call.1} parent=1 // pred_region
      _
    $region9: #{tpu_custom_call.1} parent=1 // pred_fallthru
      _
    %v12 = vld [vmem:[%s0] sm:$0x3]
    %v13 = vld [vmem:[%s0 + $0x2] sm:$0x3]
    %v14 = vld [vmem:[%s0 + $0x4] sm:$0x3]
    %v15 = vld [vmem:[%s0 + $0x6] sm:$0x3]
    %v16 = vld [vmem:[%s0 + $0x8] sm:$0x3]
    %v17 = vld [vmem:[%s0 + $0xa] sm:$0x3]
    %v18 = vld [vmem:[%s0 + $0xc] sm:$0x3]
    %v19 = vld [vmem:[%s0 + $0xe] sm:$0x3]
    %v20 = vld [vmem:[%s1] sm:$0xff]
    %v21 = vmul.f32 %v12, 5.656854
    %v22 = vmul.f32 %v13, 5.656854
    %v23 = vmul.f32 %v14, 5.656854
    %v24 = vmul.f32 %v15, 5.656854
    %v25 = vmul.f32 %v16, 5.656854
    %v26 = vmul.f32 %v17, 5.656854
    %v27 = vmul.f32 %v18, 5.656854
    %v28 = vmul.f32 %v19, 5.656854
    %v30 = vrot.slane %v20, 1
    %v31 = vrot.slane %v20, 2
    %v32 = vrot.slane %v20, 3
    %v33 = vrot.slane %v20, 4
    %v34 = vrot.slane %v20, 5
    %v35 = vrot.slane %v20, 6
    %v36 = vrot.slane %v20, 7
    %v37 = vperm.slane %v20, 0
    %v38 = vperm.slane %v30, 0
    %v39 = vperm.slane %v31, 0
    %v40 = vperm.slane %v32, 0
    %v41 = vperm.slane %v33, 0
    %v42 = vperm.slane %v34, 0
    %v43 = vperm.slane %v35, 0
    %v44 = vperm.slane %v36, 0
    %v53 = vadd.f32 %v21, %v37
    %v54 = vadd.f32 %v22, %v38
    %v55 = vadd.f32 %v23, %v39
    %v56 = vadd.f32 %v24, %v40
    %v57 = vadd.f32 %v25, %v41
    %v58 = vadd.f32 %v26, %v42
    %v59 = vadd.f32 %v27, %v43
    %v60 = vadd.f32 %v28, %v44
    %vm61 = vcmask 254976
    %62 = vst.msk [vmem:[#allocation2] sm:$0x3] %vm61, %v53
    %63 = vst.msk [vmem:[#allocation2 + $0x2] sm:$0x3] %vm61, %v54
    %64 = vst.msk [vmem:[#allocation2 + $0x4] sm:$0x3] %vm61, %v55
    %65 = vst.msk [vmem:[#allocation2 + $0x6] sm:$0x3] %vm61, %v56
    %66 = vst.msk [vmem:[#allocation2 + $0x8] sm:$0x3] %vm61, %v57
    %67 = vst.msk [vmem:[#allocation2 + $0xa] sm:$0x3] %vm61, %v58
    %68 = vst.msk [vmem:[#allocation2 + $0xc] sm:$0x3] %vm61, %v59
    %69 = vst.msk [vmem:[#allocation2 + $0xe] sm:$0x3] %vm61, %v60
    // Predicated region
    $region10: #{tpu_custom_call.1} parent=1 // pred_check
      _
    $region11: #{tpu_custom_call.1} parent=1 // pred_check_branch
      %71 = sbr.rel (0) target = $region13
    $region12: #{tpu_custom_call.1} parent=1 // pred_region
      %73 = vsyncadd [#allocation3], 0
      %s74 = sshll.u32 [#allocation2], 4
      %s75 = int_to_ptr.vmem [resolvable:$true] %s74
      %s76 = sshll.u32 %s2, 4
      %s77 = int_to_ptr.hbm [resolvable:$true] %s76
      %82 = dma.vmem_to_hbm [thread:$0]  %s75, 256, %s77, [#allocation3], 32, 32, 2
    $region13: #{tpu_custom_call.1} parent=1 // pred_fallthru
      _
    // Predicated region
    $region14: #{tpu_custom_call.1} parent=1 // pred_check
      _
    $region15: #{tpu_custom_call.1} parent=1 // pred_check_branch
      %84 = sbr.rel (0) target = $region17
    $region16: #{tpu_custom_call.1} parent=1 // pred_region
      %86 = dma.done [#allocation3], 256
    $region17: #{tpu_custom_call.1} parent=1 // pred_fallthru
      _
    %87 = vsyncpa [#allocation3], 1

</llo_original>
